<compile_context>
chip_gen: v6e
topology: v6e:2x2x1
jax: 0.10.0
libtpu: 0.0.40
codegen_flags: <defaults>
</compile_context>

<pallas_src>
import functools

import jax
import jax.numpy as jnp
from jax import lax
from jax.experimental import pallas as pl
from jax.experimental.pallas import tpu as pltpu


def _round_up(x, m):
    return ((x + m - 1) // m) * m


def custom_vnet_kernel(obsm_ref, h_ref, w1_ref, w2_ref, wg_ref, bp_ref,
                       values_ref, hout_ref, *, obs_dim, H1, H2, H):
    f32 = jnp.float32

    # Packed small params (biases / folded LN+value head), loaded once.
    bp = bp_ref[...]
    b1 = bp[0:1, :H1]
    b2 = bp[1:2, :H2]
    b_rz = bp[2:3, :2 * H]          # [b_ir + b_hr | b_iz + b_hz]
    b_in = bp[3:4, :H]
    b_hn = bp[4:5, :H]
    wv_eff = bp[5:6, :H]            # ln_gamma * w_v
    c_v = bp[6:7, 0:1]              # ln_beta . w_v + b_v

    obsm = obsm_ref[...]                          # (TM, obs_dim+1): [obs | mask]
    mask = obsm[:, obs_dim:obs_dim + 1]           # (TM, 1)

    # ---- base (MLP): Linear -> ReLU -> Linear -> ReLU ----------------------
    # The appended mask column hits a zero row of w1_ext, contributing nothing.
    x = jnp.maximum(jnp.dot(obsm, w1_ref[...], preferred_element_type=f32) + b1, 0.0)
    x = jnp.maximum(jnp.dot(x, w2_ref[...], preferred_element_type=f32) + b2, 0.0)

    # ---- RNNLayer: mask hidden state, single-step GRU (gate order r, z, n) -
    h_prev = h_ref[...] * mask                    # (TM, H)
    xh = jnp.concatenate([x, h_prev], axis=1)     # (TM, H2 + H)
    g = jnp.dot(xh, wg_ref[...], preferred_element_type=f32)   # (TM, 4H)
    # g[:, 0:H]   = x@Wir + h@Whr     g[:, H:2H]  = x@Wiz + h@Whz
    # g[:, 2H:3H] = x@Win             g[:, 3H:4H] = h@Whn

    rz = jax.nn.sigmoid(g[:, :2 * H] + b_rz)      # lane-dense r|z slab
    r = rz[:, :H]
    z = rz[:, H:2 * H]
    n = jnp.tanh(g[:, 2 * H:3 * H] + b_in + r * (g[:, 3 * H:4 * H] + b_hn))
    h_new = (1.0 - z) * n + z * h_prev

    # ---- RNNLayer LayerNorm (affine folded into the value head) ------------
    mean = jnp.mean(h_new, axis=-1, keepdims=True)
    var = jnp.mean((h_new - mean) ** 2, axis=-1, keepdims=True)
    normed = (h_new - mean) * lax.rsqrt(var + 1e-5)

    # ---- value head: lane-dense (1, TM) row via MXU contraction ------------
    vrow = lax.dot_general(wv_eff, normed, (((1,), (1,)), ((), ())),
                           preferred_element_type=f32) + c_v        # (1, TM)
    values_ref[...] = jnp.broadcast_to(vrow, values_ref.shape)      # (8, TM)
    hout_ref[...] = h_new


def pack_params(params):
    """One-time host-side packing of CustomVNet parameters (hoist out of the hot path)."""
    f32 = jnp.float32
    w1 = jnp.asarray(params["w1"], f32)
    w2 = jnp.asarray(params["w2"], f32)
    obs_dim, H1 = w1.shape
    H2 = w2.shape[1]
    H = params["w_hr"].shape[0]

    # W1 gets one extra zero row so the appended mask column is a no-op.
    w1_ext = jnp.concatenate([w1, jnp.zeros((1, H1), f32)], axis=0)

    # Fused GRU weights: [x | h] @ [[Wir Wiz Win 0], [Whr Whz 0 Whn]] -> (H2+H, 4H)
    top = jnp.concatenate([params["w_ir"], params["w_iz"], params["w_in"],
                           jnp.zeros((H2, H), f32)], axis=1)
    bot = jnp.concatenate([params["w_hr"], params["w_hz"],
                           jnp.zeros((H, H), f32), params["w_hn"]], axis=1)
    w_gru = jnp.concatenate([top, bot], axis=0).astype(f32)

    # Fold LayerNorm affine into the value head.
    w_v = jnp.asarray(params["w_v"], f32).reshape(1, -1)                     # (1, H)
    wv_eff = jnp.asarray(params["ln_gamma"], f32).reshape(1, -1) * w_v       # (1, H)
    c_v = (jnp.sum(jnp.asarray(params["ln_beta"], f32).reshape(1, -1) * w_v)
           + jnp.asarray(params["b_v"], f32).reshape(()))

    # Pre-summed r/z bias, lane-dense (1, 2H).
    b_rz = jnp.concatenate([params["b_ir"] + params["b_hr"],
                            params["b_iz"] + params["b_hz"]], axis=1)

    W = _round_up(max(H1, H2, 2 * H), 128)

    def row(v):
        v = jnp.asarray(v, f32).reshape(1, -1)
        return jnp.pad(v, ((0, 0), (0, W - v.shape[1])))

    b_packed = jnp.concatenate([
        row(params["b1"]), row(params["b2"]), row(b_rz),
        row(params["b_in"]), row(params["b_hn"]), row(wv_eff),
        row(c_v.reshape(1, 1)), jnp.zeros((1, W), f32)], axis=0)             # (8, W)

    return dict(w1_ext=w1_ext, w2=w2, w_gru=w_gru, b_packed=b_packed,
                obs_dim=obs_dim, H1=H1, H2=H2, H=H)


def custom_vnet_forward(cent_obs, rnn_states, masks, packed, *, row_block=1024):
    """cent_obs: (N, D_obs), rnn_states: (N, recurrent_n, H), masks: (N, 1)."""
    N, obs_dim = cent_obs.shape
    H, H1, H2 = packed["H"], packed["H1"], packed["H2"]
    assert obs_dim == packed["obs_dim"]

    h_in = rnn_states[:, 0, :]                                   # recurrent_n == 1
    obsm = jnp.concatenate([cent_obs.astype(jnp.float32),
                            masks.astype(jnp.float32)], axis=1)  # (N, obs_dim+1)

    # Row tile: big (amortize per-step overhead), but >= 2 blocks when N > 8 so both
    # TensorCores on v7x get work; always a multiple of 8 (or the full batch).
    if N <= 8:
        TM = N
    else:
        TM = min(row_block, _round_up(pl.cdiv(N, 2), 8))
    num_blocks = pl.cdiv(N, TM)

    kernel = functools.partial(custom_vnet_kernel, obs_dim=obs_dim, H1=H1, H2=H2, H=H)
    rows_map = lambda i: (i, 0)
    rep_map = lambda i: (0, 0)

    values8, h_out = pl.pallas_call(
        kernel,
        out_shape=(jax.ShapeDtypeStruct((num_blocks * 8, TM), jnp.float32),
                   jax.ShapeDtypeStruct((N, H), jnp.float32)),
        grid=(num_blocks,),
        in_specs=[
            pl.BlockSpec((TM, obs_dim + 1), rows_map),           # [obs | mask] rows
            pl.BlockSpec((TM, H), rows_map),                     # h_in rows
            pl.BlockSpec((obs_dim + 1, H1), rep_map),            # W1 (+ zero mask row)
            pl.BlockSpec((H1, H2), rep_map),                     # W2
            pl.BlockSpec((H2 + H, 4 * H), rep_map),              # fused GRU weights
            pl.BlockSpec((8, packed["b_packed"].shape[1]), rep_map),  # packed biases
        ],
        out_specs=(
            pl.BlockSpec((8, TM), rows_map),                     # lane-dense values rows
            pl.BlockSpec((TM, H), rows_map),                     # new hidden state
        ),
        input_output_aliases={1: 1},                             # reuse h_in buffer for h_out
        compiler_params=pltpu.CompilerParams(dimension_semantics=("parallel",)),
    )(obsm, h_in, packed["w1_ext"], packed["w2"], packed["w_gru"], packed["b_packed"])

    values = (values8.reshape(num_blocks, 8, TM)[:, 0, :]        # one row per block
              .reshape(-1)[:N].reshape(N, 1))
    return values, h_out[:, None, :]                             # restore (N, recurrent_n, H)


def make_params(key, obs_dim, hidden_sizes):
    """Deterministic synthetic parameters (scaled normal)."""
    H1, H2 = hidden_sizes
    H = hidden_sizes[-1]
    ks = jax.random.split(key, 16)

    def w(k, shape, scale):
        return (scale * jax.random.normal(k, shape)).astype(jnp.float32)

    return {
        "w1": w(ks[0], (obs_dim, H1), 0.1), "b1": jnp.zeros((1, H1), jnp.float32),
        "w2": w(ks[1], (H1, H2), 0.1),      "b2": jnp.zeros((1, H2), jnp.float32),
        # GRU (input dim = repr_dim = H2, hidden = H); PyTorch gate order r,z,n
        "w_ir": w(ks[2], (H2, H), 0.1), "w_iz": w(ks[3], (H2, H), 0.1), "w_in": w(ks[4], (H2, H), 0.1),
        "w_hr": w(ks[5], (H, H), 0.1),  "w_hz": w(ks[6], (H, H), 0.1),  "w_hn": w(ks[7], (H, H), 0.1),
        "b_ir": w(ks[8], (1, H), 0.01), "b_iz": w(ks[9], (1, H), 0.01), "b_in": w(ks[10], (1, H), 0.01),
        "b_hr": w(ks[11], (1, H), 0.01), "b_hz": w(ks[12], (1, H), 0.01), "b_hn": w(ks[13], (1, H), 0.01),
        "ln_gamma": jnp.ones((1, H), jnp.float32), "ln_beta": jnp.zeros((1, H), jnp.float32),
        "w_v": w(ks[14], (H, 1), 0.1), "b_v": jnp.zeros((1, 1), jnp.float32),  # v_out bias init to 0
    }


def reference_forward(cent_obs, rnn_states, masks, p):
    x = jnp.maximum(cent_obs @ p["w1"] + p["b1"], 0.0)
    x = jnp.maximum(x @ p["w2"] + p["b2"], 0.0)
    h = rnn_states[:, 0, :] * masks
    r = jax.nn.sigmoid(x @ p["w_ir"] + p["b_ir"] + h @ p["w_hr"] + p["b_hr"])
    z = jax.nn.sigmoid(x @ p["w_iz"] + p["b_iz"] + h @ p["w_hz"] + p["b_hz"])
    n = jnp.tanh(x @ p["w_in"] + p["b_in"] + r * (h @ p["w_hn"] + p["b_hn"]))
    h_new = (1.0 - z) * n + z * h
    mean = jnp.mean(h_new, axis=-1, keepdims=True)
    var = jnp.mean((h_new - mean) ** 2, axis=-1, keepdims=True)
    crit = (h_new - mean) / jnp.sqrt(var + 1e-5) * p["ln_gamma"] + p["ln_beta"]
    return crit @ p["w_v"] + p["b_v"], h_new[:, None, :]


if __name__ == "__main__":
    N, OBS_DIM = 24, 32              # 24 rows -> 2 row blocks (one partial) at TM=16
    HIDDEN_SIZES = [64, 64]          # args['hidden_sizes']
    RECURRENT_N = 1                  # args['recurrent_n']
    H = HIDDEN_SIZES[-1]

    key = jax.random.PRNGKey(0)
    k_obs, k_h, k_p = jax.random.split(key, 3)

    cent_obs = jax.random.normal(k_obs, (N, OBS_DIM), dtype=jnp.float32)
    rnn_states = jax.random.normal(k_h, (N, RECURRENT_N, H), dtype=jnp.float32)
    masks = jnp.ones((N, 1), dtype=jnp.float32).at[0, 0].set(0.0).at[5, 0].set(0.0)

    params = make_params(k_p, OBS_DIM, HIDDEN_SIZES)
    packed = pack_params(params)     # packed once, reused every forward call

    values, new_states = custom_vnet_forward(cent_obs, rnn_states, masks, packed)
    jax.block_until_ready((values, new_states))

    v_ref, h_ref = reference_forward(cent_obs, rnn_states, masks, params)
    assert values.shape == (N, 1) and new_states.shape == (N, RECURRENT_N, H)
    assert jnp.allclose(values, v_ref, atol=1e-4, rtol=1e-4)
    assert jnp.allclose(new_states, h_ref, atol=1e-4, rtol=1e-4)

    print("KERNEL_OK")
</pallas_src>

<mosaic_0001>
module attributes {stable_mosaic.version = 11 : i64} {
  func.func @custom_vnet_kernel(%arg0: i32, %arg1: memref<16x33xf32, #tpu.memory_space<vmem>>, %arg2: memref<16x64xf32, #tpu.memory_space<vmem>>, %arg3: memref<33x64xf32, #tpu.memory_space<vmem>>, %arg4: memref<64x64xf32, #tpu.memory_space<vmem>>, %arg5: memref<128x256xf32, #tpu.memory_space<vmem>>, %arg6: memref<8x128xf32, #tpu.memory_space<vmem>>, %arg7: memref<8x16xf32, #tpu.memory_space<vmem>>, %arg8: memref<16x64xf32, #tpu.memory_space<vmem>>) attributes {dimension_semantics = [#tpu.dimension_semantics<parallel>], iteration_bounds = array<i64: 2>, scalar_prefetch = 0 : i64, scratch_operands = 0 : i64, tpu.core_type = #tpu.core_type<tc>, window_params = [{transform_indices = @transform_0, window_bounds = array<i64: 16, 33>}, {transform_indices = @transform_1, window_bounds = array<i64: 16, 64>}, {pipeline_mode = #tpu.pipeline_mode<synchronous>, transform_indices = @transform_2, window_bounds = array<i64: 33, 64>}, {pipeline_mode = #tpu.pipeline_mode<synchronous>, transform_indices = @transform_3, window_bounds = array<i64: 64, 64>}, {pipeline_mode = #tpu.pipeline_mode<synchronous>, transform_indices = @transform_4, window_bounds = array<i64: 128, 256>}, {pipeline_mode = #tpu.pipeline_mode<synchronous>, transform_indices = @transform_5, window_bounds = array<i64: 8, 128>}, {transform_indices = @transform_6, window_bounds = array<i64: 8, 16>}, {transform_indices = @transform_7, window_bounds = array<i64: 16, 64>}]} {
    %c0 = arith.constant 0 : index
    %c0_0 = arith.constant 0 : index
    %0 = vector.load %arg6[%c0, %c0_0] : memref<8x128xf32, #tpu.memory_space<vmem>>, vector<8x128xf32>
    %1 = vector.extract_strided_slice %0 {offsets = [0, 0], sizes = [1, 64], strides = [1, 1]} : vector<8x128xf32> to vector<1x64xf32>
    %2 = vector.extract_strided_slice %0 {offsets = [1, 0], sizes = [1, 64], strides = [1, 1]} : vector<8x128xf32> to vector<1x64xf32>
    %3 = vector.extract_strided_slice %0 {offsets = [2, 0], sizes = [1, 128], strides = [1, 1]} : vector<8x128xf32> to vector<1x128xf32>
    %4 = vector.extract_strided_slice %0 {offsets = [3, 0], sizes = [1, 64], strides = [1, 1]} : vector<8x128xf32> to vector<1x64xf32>
    %5 = vector.extract_strided_slice %0 {offsets = [4, 0], sizes = [1, 64], strides = [1, 1]} : vector<8x128xf32> to vector<1x64xf32>
    %6 = vector.extract_strided_slice %0 {offsets = [5, 0], sizes = [1, 64], strides = [1, 1]} : vector<8x128xf32> to vector<1x64xf32>
    %7 = vector.extract_strided_slice %0 {offsets = [6, 0], sizes = [1, 1], strides = [1, 1]} : vector<8x128xf32> to vector<1x1xf32>
    %c0_1 = arith.constant 0 : index
    %c0_2 = arith.constant 0 : index
    %8 = vector.load %arg1[%c0_1, %c0_2] : memref<16x33xf32, #tpu.memory_space<vmem>>, vector<16x33xf32>
    %9 = vector.extract_strided_slice %8 {offsets = [0, 32], sizes = [16, 1], strides = [1, 1]} : vector<16x33xf32> to vector<16x1xf32>
    %c0_3 = arith.constant 0 : index
    %c0_4 = arith.constant 0 : index
    %10 = vector.load %arg3[%c0_3, %c0_4] : memref<33x64xf32, #tpu.memory_space<vmem>>, vector<33x64xf32>
    %cst = arith.constant dense<0.000000e+00> : vector<16x64xf32>
    %11 = tpu.matmul %8, %10, %cst {dimension_numbers = #tpu.dot_dimension_numbers<[1], [0], [0], [1], [0, 0, 1, 1], [], []>} : vector<16x33xf32>, vector<33x64xf32>, vector<16x64xf32> -> vector<16x64xf32>
    %12 = vector.broadcast %1 : vector<1x64xf32> to vector<16x64xf32>
    %13 = arith.addf %11, %12 : vector<16x64xf32>
    %cst_5 = arith.constant 0.000000e+00 : f32
    %14 = vector.broadcast %cst_5 : f32 to vector<16x64xf32>
    %15 = arith.maximumf %13, %14 : vector<16x64xf32>
    %c0_6 = arith.constant 0 : index
    %c0_7 = arith.constant 0 : index
    %16 = vector.load %arg4[%c0_6, %c0_7] : memref<64x64xf32, #tpu.memory_space<vmem>>, vector<64x64xf32>
    %cst_8 = arith.constant dense<0.000000e+00> : vector<16x64xf32>
    %17 = tpu.matmul %15, %16, %cst_8 {dimension_numbers = #tpu.dot_dimension_numbers<[1], [0], [0], [1], [0, 0, 1, 1], [], []>} : vector<16x64xf32>, vector<64x64xf32>, vector<16x64xf32> -> vector<16x64xf32>
    %18 = vector.broadcast %2 : vector<1x64xf32> to vector<16x64xf32>
    %19 = arith.addf %17, %18 : vector<16x64xf32>
    %cst_9 = arith.constant 0.000000e+00 : f32
    %20 = vector.broadcast %cst_9 : f32 to vector<16x64xf32>
    %21 = arith.maximumf %19, %20 : vector<16x64xf32>
    %c0_10 = arith.constant 0 : index
    %c0_11 = arith.constant 0 : index
    %22 = vector.load %arg2[%c0_10, %c0_11] : memref<16x64xf32, #tpu.memory_space<vmem>>, vector<16x64xf32>
    %23 = vector.broadcast %9 : vector<16x1xf32> to vector<16x64xf32>
    %24 = arith.mulf %22, %23 : vector<16x64xf32>
    %25 = tpu.concatenate %21, %24 in 1 : vector<16x64xf32>, vector<16x64xf32> -> vector<16x128xf32>
    %c0_12 = arith.constant 0 : index
    %c0_13 = arith.constant 0 : index
    %26 = vector.load %arg5[%c0_12, %c0_13] : memref<128x256xf32, #tpu.memory_space<vmem>>, vector<128x256xf32>
    %cst_14 = arith.constant dense<0.000000e+00> : vector<16x256xf32>
    %27 = tpu.matmul %25, %26, %cst_14 {dimension_numbers = #tpu.dot_dimension_numbers<[1], [0], [0], [1], [0, 0, 1, 1], [], []>} : vector<16x128xf32>, vector<128x256xf32>, vector<16x256xf32> -> vector<16x256xf32>
    %28 = vector.extract_strided_slice %27 {offsets = [0, 0], sizes = [16, 128], strides = [1, 1]} : vector<16x256xf32> to vector<16x128xf32>
    %29 = vector.broadcast %3 : vector<1x128xf32> to vector<16x128xf32>
    %30 = arith.addf %28, %29 : vector<16x128xf32>
    %31 = arith.negf %30 : vector<16x128xf32>
    %32 = math.exp %31 : vector<16x128xf32>
    %cst_15 = arith.constant 1.000000e+00 : f32
    %33 = vector.broadcast %cst_15 : f32 to vector<16x128xf32>
    %34 = arith.addf %33, %32 : vector<16x128xf32>
    %35 = arith.divf %33, %34 : vector<16x128xf32>
    %36 = vector.extract_strided_slice %35 {offsets = [0, 0], sizes = [16, 64], strides = [1, 1]} : vector<16x128xf32> to vector<16x64xf32>
    %37 = vector.extract_strided_slice %35 {offsets = [0, 64], sizes = [16, 64], strides = [1, 1]} : vector<16x128xf32> to vector<16x64xf32>
    %38 = vector.extract_strided_slice %27 {offsets = [0, 128], sizes = [16, 64], strides = [1, 1]} : vector<16x256xf32> to vector<16x64xf32>
    %39 = vector.broadcast %4 : vector<1x64xf32> to vector<16x64xf32>
    %40 = arith.addf %38, %39 : vector<16x64xf32>
    %41 = vector.extract_strided_slice %27 {offsets = [0, 192], sizes = [16, 64], strides = [1, 1]} : vector<16x256xf32> to vector<16x64xf32>
    %42 = vector.broadcast %5 : vector<1x64xf32> to vector<16x64xf32>
    %43 = arith.addf %41, %42 : vector<16x64xf32>
    %44 = arith.mulf %36, %43 : vector<16x64xf32>
    %45 = arith.addf %40, %44 : vector<16x64xf32>
    %46 = math.tanh %45 : vector<16x64xf32>
    %cst_16 = arith.constant 1.000000e+00 : f32
    %47 = vector.broadcast %cst_16 : f32 to vector<16x64xf32>
    %48 = arith.subf %47, %37 : vector<16x64xf32>
    %49 = arith.mulf %48, %46 : vector<16x64xf32>
    %50 = arith.mulf %37, %24 : vector<16x64xf32>
    %51 = arith.addf %49, %50 : vector<16x64xf32>
    %cst_17 = arith.constant dense<0.000000e+00> : vector<16xf32>
    %52 = vector.multi_reduction <add>, %51, %cst_17 [1] : vector<16x64xf32> to vector<16xf32>
    %53 = vector.shape_cast %52 : vector<16xf32> to vector<16x1xf32>
    %cst_18 = arith.constant 6.400000e+01 : f32
    %54 = vector.broadcast %cst_18 : f32 to vector<16x1xf32>
    %55 = arith.divf %53, %54 : vector<16x1xf32>
    %56 = vector.broadcast %55 : vector<16x1xf32> to vector<16x64xf32>
    %57 = arith.subf %51, %56 : vector<16x64xf32>
    %58 = arith.mulf %57, %57 : vector<16x64xf32>
    %cst_19 = arith.constant dense<0.000000e+00> : vector<16xf32>
    %59 = vector.multi_reduction <add>, %58, %cst_19 [1] : vector<16x64xf32> to vector<16xf32>
    %60 = vector.shape_cast %59 : vector<16xf32> to vector<16x1xf32>
    %cst_20 = arith.constant 6.400000e+01 : f32
    %61 = vector.broadcast %cst_20 : f32 to vector<16x1xf32>
    %62 = arith.divf %60, %61 : vector<16x1xf32>
    %63 = vector.broadcast %55 : vector<16x1xf32> to vector<16x64xf32>
    %64 = arith.subf %51, %63 : vector<16x64xf32>
    %cst_21 = arith.constant 9.99999974E-6 : f32
    %65 = vector.broadcast %cst_21 : f32 to vector<16x1xf32>
    %66 = arith.addf %62, %65 : vector<16x1xf32>
    %67 = math.rsqrt %66 : vector<16x1xf32>
    %68 = vector.broadcast %67 : vector<16x1xf32> to vector<16x64xf32>
    %69 = arith.mulf %64, %68 : vector<16x64xf32>
    %cst_22 = arith.constant dense<0.000000e+00> : vector<1x16xf32>
    %70 = tpu.matmul %6, %69, %cst_22 {dimension_numbers = #tpu.dot_dimension_numbers<[1], [1], [0], [0], [0, 0, 1, 0], [], []>} : vector<1x64xf32>, vector<16x64xf32>, vector<1x16xf32> -> vector<1x16xf32>
    %71 = vector.broadcast %7 : vector<1x1xf32> to vector<1x16xf32>
    %72 = arith.addf %70, %71 : vector<1x16xf32>
    %73 = vector.shape_cast %72 : vector<1x16xf32> to vector<1x16xf32>
    %74 = vector.broadcast %73 : vector<1x16xf32> to vector<8x16xf32>
    %c0_23 = arith.constant 0 : index
    %c0_24 = arith.constant 0 : index
    %75 = vector.load %arg7[%c0_23, %c0_24] : memref<8x16xf32, #tpu.memory_space<vmem>>, vector<8x16xf32>
    tpu.vector_store %arg7[%c0_23, %c0_24], %74 {strides = array<i32>} : memref<8x16xf32, #tpu.memory_space<vmem>>, vector<8x16xf32>,
    %c0_25 = arith.constant 0 : index
    %c0_26 = arith.constant 0 : index
    %76 = vector.load %arg8[%c0_25, %c0_26] : memref<16x64xf32, #tpu.memory_space<vmem>>, vector<16x64xf32>
    tpu.vector_store %arg8[%c0_25, %c0_26], %51 {strides = array<i32>} : memref<16x64xf32, #tpu.memory_space<vmem>>, vector<16x64xf32>,
    return
  }
  func.func @transform_0(%arg0: i32) -> (i32, i32) {
    %c0_i32 = arith.constant 0 : i32
    %c0_i32_0 = arith.constant 0 : i32
    return %arg0, %c0_i32 : i32, i32
  }
  func.func @transform_1(%arg0: i32) -> (i32, i32) {
    %c0_i32 = arith.constant 0 : i32
    %c0_i32_0 = arith.constant 0 : i32
    return %arg0, %c0_i32 : i32, i32
  }
  func.func @transform_2(%arg0: i32) -> (i32, i32) {
    %c0_i32 = arith.constant 0 : i32
    %c0_i32_0 = arith.constant 0 : i32
    %c0_i32_1 = arith.constant 0 : i32
    return %c0_i32, %c0_i32_0 : i32, i32
  }
  func.func @transform_3(%arg0: i32) -> (i32, i32) {
    %c0_i32 = arith.constant 0 : i32
    %c0_i32_0 = arith.constant 0 : i32
    %c0_i32_1 = arith.constant 0 : i32
    return %c0_i32, %c0_i32_0 : i32, i32
  }
  func.func @transform_4(%arg0: i32) -> (i32, i32) {
    %c0_i32 = arith.constant 0 : i32
    %c0_i32_0 = arith.constant 0 : i32
    %c0_i32_1 = arith.constant 0 : i32
    return %c0_i32, %c0_i32_0 : i32, i32
  }
  func.func @transform_5(%arg0: i32) -> (i32, i32) {
    %c0_i32 = arith.constant 0 : i32
    %c0_i32_0 = arith.constant 0 : i32
    %c0_i32_1 = arith.constant 0 : i32
    return %c0_i32, %c0_i32_0 : i32, i32
  }
  func.func @transform_6(%arg0: i32) -> (i32, i32) {
    %c0_i32 = arith.constant 0 : i32
    %c0_i32_0 = arith.constant 0 : i32
    return %arg0, %c0_i32 : i32, i32
  }
  func.func @transform_7(%arg0: i32) -> (i32, i32) {
    %c0_i32 = arith.constant 0 : i32
    %c0_i32_0 = arith.constant 0 : i32
    return %arg0, %c0_i32 : i32, i32
  }
}

</mosaic_0001>

<llo_original>
// kernel: tpu_custom_call.1
$region0: #{tpu_custom_call.1}
  #allocation0 [shape = 'u32[]', space=smem, size = 0x4, offset = 0x4, fixed_abs, tag = 'smem constant byte address 0x4 - core index']
  #allocation1 [shape = 'u32[144,128]{1,0:T(1,128)}', space=vmem, size = 0x12000, scoped, tag = 'internal scratch']
  %s0 = inlined_call_operand.hbm [shape: f32[24,33], index: 0, kind: input, shape index: {}]
  %s1 = inlined_call_operand.hbm [shape: f32[24,64], index: 1, kind: input, shape index: {}, may-alias: {1,7}]
  %s2 = inlined_call_operand.vmem [shape: f32[33,64], index: 2, kind: input, shape index: {}]
  %s3 = inlined_call_operand.hbm [shape: f32[64,64], index: 3, kind: input, shape index: {}]
  %s4 = inlined_call_operand.hbm [shape: f32[128,256], index: 4, kind: input, shape index: {}]
  %s5 = inlined_call_operand.vmem [shape: f32[8,128], index: 5, kind: input, shape index: {}]
  %s6 = inlined_call_operand.hbm [shape: f32[16,16], index: 6, kind: output, shape index: {0}]
  %s7 = inlined_call_operand.hbm [shape: f32[24,64], index: 7, kind: output, shape index: {1}, may-alias: {1,7}]
  %8 = xla_tuple %s6, %s7
  %s9 = sld [smem:[#allocation0]]
  $region81: #{tpu_custom_call.1} parent=0
    _
  %s11 = ssub.s32 1, %s9
  %s12 = scalar_select 0, %s11, %s9
  $region1: #{tpu_custom_call.1} parent=0
    #allocation2 [shape = 'u8[16384]{0}', space=vmem, size = 0x4000, scoped, tag = 'input window, operand 0']
    #allocation3 [shape = 's32[2]{0}', space=sflag, size = 0x8, scoped, tag = 'scoped memory for tpu_custom_call.1']
    #allocation4 [shape = 's32[2]{0}', space=sflag, size = 0x8, scoped, tag = 'scoped memory for tpu_custom_call.1']
    #allocation5 [shape = 'u8[16384]{0}', space=vmem, size = 0x4000, scoped, tag = 'input window, operand 1']
    #allocation6 [shape = 's32[2]{0}', space=sflag, size = 0x8, scoped, tag = 'scoped memory for tpu_custom_call.1']
    #allocation7 [shape = 'u8[32768]{0}', space=vmem, size = 0x8000, scoped, tag = 'input window, operand 3, single buffered']
    #allocation8 [shape = 'u8[131072]{0}', space=vmem, size = 0x20000, scoped, tag = 'input window, operand 4, single buffered']
    #allocation9 [shape = 's32[1]{0}', space=sflag, size = 0x4, scoped, tag = 'scoped memory for tpu_custom_call.1']
    #allocation10 [shape = 'u8[8192]{0}', space=vmem, size = 0x2000, scoped, tag = 'output window, operand 0']
    #allocation11 [shape = 'u8[16384]{0}', space=vmem, size = 0x4000, scoped, tag = 'output window, operand 1']
    #allocation12 [shape = 's32[2]{0}', space=sflag, size = 0x8, scoped, tag = 'scoped memory for tpu_custom_call.1']
    %13 = vsyncpa [#allocation3], 0
    %s14 = scalar_lea.sflag [#allocation3], 1
    %15 = vsyncpa %s14, 0
    %16 = vsyncpa [#allocation6], 0
    %s17 = scalar_lea.sflag [#allocation6], 1
    %18 = vsyncpa %s17, 0
    %19 = vsyncpa [#allocation9], 0
    %20 = vsyncpa [#allocation4], 0
    %s21 = scalar_lea.sflag [#allocation4], 1
    %22 = vsyncpa %s21, 0
    %23 = vsyncpa [#allocation12], 0
    %s24 = scalar_lea.sflag [#allocation12], 1
    %25 = vsyncpa %s24, 0
    loop: start=0, step=1, limit=4
    $region2: #{tpu_custom_call.1} parent=1 // loop_pre_header
      _
    $region3: #{tpu_custom_call.1} parent=1 // loop_header
      %s27 = sphi 0, %s31
      %p28 = scmp.ge.s32.totalorder %s27, 4
      %s37 = sphi 0, %s39
      %s40 = sphi 0, %s37
      %s41 = sphi 0, %s40
      %s57 = sphi 0, %s41
      %s63 = sphi 0, %s65
      %s66 = sphi 0, %s63
      %s67 = sphi 0, %s66
      %s83 = sphi 0, %s67
      %s87 = sphi 0, %s87
      %s89 = sphi 0, %s87
      %s90 = sphi 0, %s89
      %s104 = sphi 0, %s90
      %s108 = sphi 0, %s108
      %s110 = sphi 0, %s108
      %s111 = sphi 0, %s110
      %s125 = sphi 0, %s111
      %s129 = sphi 0, %s129
      %s131 = sphi 0, %s129
      %s132 = sphi 0, %s131
      %s146 = sphi 0, %s132
      %s150 = sphi 0, %s150
      %s152 = sphi 0, %s150
      %s153 = sphi 0, %s152
      %s167 = sphi 0, %s153
      %s173 = sphi 0, %s175
      %s176 = sphi 0, %s173
      %s177 = sphi 0, %s176
      %s193 = sphi 0, %s177
      %s199 = sphi 0, %s201
      %s202 = sphi 0, %s199
      %s203 = sphi 0, %s202
      %s219 = sphi 0, %s203
    $region4: #{tpu_custom_call.1} parent=1 // loop_header_branch
      %30 = sbr.rel (%p28) target = $region8
    $region5: #{tpu_custom_call.1} parent=1 // loop_body
      %s32 = ssub.s32 %s27, 1
      %s33 = ssub.s32 %s27, 2
      %s34 = sadd.s32 %s27, 1
      %s35 = ssub.s32 %s27, %s34
      %p36 = scmp.eq.s32.totalorder %s35, 0
      %s38 = sadd.s32 %s37, 1
      %s39 = scalar_select %p36, %s37, %s38
      %p42 = pneg %p36
      %p43 = scmp.eq.s32.totalorder %s27, 1
      %p44 = por %p42, %p43
      %p45 = scmp.ne.s32.totalorder %s37, %s40
      %p46 = scmp.eq.s32.totalorder %s27, 0
      %p47 = por %p45, %p46
      %p48 = scmp.ne.s32.totalorder %s37, %s40
      %p49 = scmp.eq.s32.totalorder %s32, 1
      %p50 = por %p48, %p49
      %p51 = scmp.ne.s32.totalorder %s40, %s41
      %p52 = scmp.eq.s32.totalorder %s32, 0
      %p53 = por %p51, %p52
      %p54 = scmp.ne.s32.totalorder %s40, %s41
      %p55 = scmp.eq.s32.totalorder %s33, 1
      %p56 = por %p54, %p55
      %p58 = scmp.ne.s32.totalorder %s41, %s57
      %p59 = scmp.eq.s32.totalorder %s33, 0
      %p60 = por %p58, %p59
      %s61 = ssub.s32 %s27, %s34
      %p62 = scmp.eq.s32.totalorder %s61, 0
      %s64 = sadd.s32 %s63, 1
      %s65 = scalar_select %p62, %s63, %s64
      %p68 = pneg %p62
      %p69 = scmp.eq.s32.totalorder %s27, 1
      %p70 = por %p68, %p69
      %p71 = scmp.ne.s32.totalorder %s63, %s66
      %p72 = scmp.eq.s32.totalorder %s27, 0
      %p73 = por %p71, %p72
      %p74 = scmp.ne.s32.totalorder %s63, %s66
      %p75 = scmp.eq.s32.totalorder %s32, 1
      %p76 = por %p74, %p75
      %p77 = scmp.ne.s32.totalorder %s66, %s67
      %p78 = scmp.eq.s32.totalorder %s32, 0
      %p79 = por %p77, %p78
      %p80 = scmp.ne.s32.totalorder %s66, %s67
      %p81 = scmp.eq.s32.totalorder %s33, 1
      %p82 = por %p80, %p81
      %p84 = scmp.ne.s32.totalorder %s67, %s83
      %p85 = scmp.eq.s32.totalorder %s33, 0
      %p86 = por %p84, %p85
      %s88 = sadd.s32 %s87, 1
      %p91 = scmp.eq.s32.totalorder %s27, 1
      %p92 = scmp.ne.s32.totalorder %s87, %s89
      %p93 = scmp.eq.s32.totalorder %s27, 0
      %p94 = por %p92, %p93
      %p95 = scmp.ne.s32.totalorder %s87, %s89
      %p96 = scmp.eq.s32.totalorder %s32, 1
      %p97 = por %p95, %p96
      %p98 = scmp.ne.s32.totalorder %s89, %s90
      %p99 = scmp.eq.s32.totalorder %s32, 0
      %p100 = por %p98, %p99
      %p101 = scmp.ne.s32.totalorder %s89, %s90
      %p102 = scmp.eq.s32.totalorder %s33, 1
      %p103 = por %p101, %p102
      %p105 = scmp.ne.s32.totalorder %s90, %s104
      %p106 = scmp.eq.s32.totalorder %s33, 0
      %p107 = por %p105, %p106
      %s109 = sadd.s32 %s108, 1
      %p112 = scmp.eq.s32.totalorder %s27, 1
      %p113 = scmp.ne.s32.totalorder %s108, %s110
      %p114 = scmp.eq.s32.totalorder %s27, 0
      %p115 = por %p113, %p114
      %p116 = scmp.ne.s32.totalorder %s108, %s110
      %p117 = scmp.eq.s32.totalorder %s32, 1
      %p118 = por %p116, %p117
      %p119 = scmp.ne.s32.totalorder %s110, %s111
      %p120 = scmp.eq.s32.totalorder %s32, 0
      %p121 = por %p119, %p120
      %p122 = scmp.ne.s32.totalorder %s110, %s111
      %p123 = scmp.eq.s32.totalorder %s33, 1
      %p124 = por %p122, %p123
      %p126 = scmp.ne.s32.totalorder %s111, %s125
      %p127 = scmp.eq.s32.totalorder %s33, 0
      %p128 = por %p126, %p127
      %s130 = sadd.s32 %s129, 1
      %p133 = scmp.eq.s32.totalorder %s27, 1
      %p134 = scmp.ne.s32.totalorder %s129, %s131
      %p135 = scmp.eq.s32.totalorder %s27, 0
      %p136 = por %p134, %p135
      %p137 = scmp.ne.s32.totalorder %s129, %s131
      %p138 = scmp.eq.s32.totalorder %s32, 1
      %p139 = por %p137, %p138
      %p140 = scmp.ne.s32.totalorder %s131, %s132
      %p141 = scmp.eq.s32.totalorder %s32, 0
      %p142 = por %p140, %p141
      %p143 = scmp.ne.s32.totalorder %s131, %s132
      %p144 = scmp.eq.s32.totalorder %s33, 1
      %p145 = por %p143, %p144
      %p147 = scmp.ne.s32.totalorder %s132, %s146
      %p148 = scmp.eq.s32.totalorder %s33, 0
      %p149 = por %p147, %p148
      %s151 = sadd.s32 %s150, 1
      %p154 = scmp.eq.s32.totalorder %s27, 1
      %p155 = scmp.ne.s32.totalorder %s150, %s152
      %p156 = scmp.eq.s32.totalorder %s27, 0
      %p157 = por %p155, %p156
      %p158 = scmp.ne.s32.totalorder %s150, %s152
      %p159 = scmp.eq.s32.totalorder %s32, 1
      %p160 = por %p158, %p159
      %p161 = scmp.ne.s32.totalorder %s152, %s153
      %p162 = scmp.eq.s32.totalorder %s32, 0
      %p163 = por %p161, %p162
      %p164 = scmp.ne.s32.totalorder %s152, %s153
      %p165 = scmp.eq.s32.totalorder %s33, 1
      %p166 = por %p164, %p165
      %p168 = scmp.ne.s32.totalorder %s153, %s167
      %p169 = scmp.eq.s32.totalorder %s33, 0
      %p170 = por %p168, %p169
      %s171 = ssub.s32 %s27, %s34
      %p172 = scmp.eq.s32.totalorder %s171, 0
      %s174 = sadd.s32 %s173, 1
      %s175 = scalar_select %p172, %s173, %s174
      %p178 = pneg %p172
      %p179 = scmp.eq.s32.totalorder %s27, 1
      %p180 = por %p178, %p179
      %p181 = scmp.ne.s32.totalorder %s173, %s176
      %p182 = scmp.eq.s32.totalorder %s27, 0
      %p183 = por %p181, %p182
      %p184 = scmp.ne.s32.totalorder %s173, %s176
      %p185 = scmp.eq.s32.totalorder %s32, 1
      %p186 = por %p184, %p185
      %p187 = scmp.ne.s32.totalorder %s176, %s177
      %p188 = scmp.eq.s32.totalorder %s32, 0
      %p189 = por %p187, %p188
      %p190 = scmp.ne.s32.totalorder %s176, %s177
      %p191 = scmp.eq.s32.totalorder %s33, 1
      %p192 = por %p190, %p191
      %p194 = scmp.ne.s32.totalorder %s177, %s193
      %p195 = scmp.eq.s32.totalorder %s33, 0
      %p196 = por %p194, %p195
      %s197 = ssub.s32 %s27, %s34
      %p198 = scmp.eq.s32.totalorder %s197, 0
      %s200 = sadd.s32 %s199, 1
      %s201 = scalar_select %p198, %s199, %s200
      %p204 = pneg %p198
      %p205 = scmp.eq.s32.totalorder %s27, 1
      %p206 = por %p204, %p205
      %p207 = scmp.ne.s32.totalorder %s199, %s202
      %p208 = scmp.eq.s32.totalorder %s27, 0
      %p209 = por %p207, %p208
      %p210 = scmp.ne.s32.totalorder %s199, %s202
      %p211 = scmp.eq.s32.totalorder %s32, 1
      %p212 = por %p210, %p211
      %p213 = scmp.ne.s32.totalorder %s202, %s203
      %p214 = scmp.eq.s32.totalorder %s32, 0
      %p215 = por %p213, %p214
      %p216 = scmp.ne.s32.totalorder %s202, %s203
      %p217 = scmp.eq.s32.totalorder %s33, 1
      %p218 = por %p216, %p217
      %p220 = scmp.ne.s32.totalorder %s203, %s219
      %p221 = scmp.eq.s32.totalorder %s33, 0
      %p222 = por %p220, %p221
      %p223 = scmp.le.s32.totalorder 1, %s27
      %p224 = scmp.lt.s32.totalorder %s27, 3
      %p225 = pnand %p223, %p224
      %p226 = pneg %p225
      // Predicated region
      $region9: #{tpu_custom_call.1} parent=5 // pred_check
        _
      $region10: #{tpu_custom_call.1} parent=5 // pred_check_branch
        %228 = sbr.rel (%p225) target = $region12
      $region11: #{tpu_custom_call.1} parent=5 // pred_region
        %s229 = ssub.s32 %s27, 1
        // Predicated region
        $region13: #{tpu_custom_call.1} parent=11 // pred_check
          %p230 = pneg %p100
        $region14: #{tpu_custom_call.1} parent=11 // pred_check_branch
          %232 = sbr.rel (%p230) target = $region16
        $region15: #{tpu_custom_call.1} parent=11 // pred_region
          _
        $region16: #{tpu_custom_call.1} parent=11 // pred_fallthru
          _
        // Predicated region
        $region17: #{tpu_custom_call.1} parent=11 // pred_check
          %p233 = pneg %p121
        $region18: #{tpu_custom_call.1} parent=11 // pred_check_branch
          %235 = sbr.rel (%p233) target = $region20
        $region19: #{tpu_custom_call.1} parent=11 // pred_region
          %s237 = ssub.s32 1024, 1024
          %238 = vsyncadd [#allocation6], %s237
          %s239 = sshll.u32 [#allocation7], 4
          %s240 = int_to_ptr.vmem [resolvable:$true] %s239
          %245 = dma.hbm_to_vmem [thread:$0]  %s3, 1024, %s240, [#allocation6], 128, 128, 8
        $region20: #{tpu_custom_call.1} parent=11 // pred_fallthru
          _
        // Predicated region
        $region21: #{tpu_custom_call.1} parent=11 // pred_check
          %p246 = pneg %p142
        $region22: #{tpu_custom_call.1} parent=11 // pred_check_branch
          %248 = sbr.rel (%p246) target = $region24
        $region23: #{tpu_custom_call.1} parent=11 // pred_region
          %s250 = ssub.s32 4096, 4096
          %251 = vsyncadd [#allocation9], %s250
          %s252 = sshll.u32 [#allocation8], 4
          %s253 = int_to_ptr.vmem [resolvable:$true] %s252
          %258 = dma.hbm_to_vmem [thread:$0]  %s4, 4096, %s253, [#allocation9], 256, 256, 16
        $region24: #{tpu_custom_call.1} parent=11 // pred_fallthru
          _
        // Predicated region
        $region25: #{tpu_custom_call.1} parent=11 // pred_check
          %p259 = pneg %p163
        $region26: #{tpu_custom_call.1} parent=11 // pred_check_branch
          %261 = sbr.rel (%p259) target = $region28
        $region27: #{tpu_custom_call.1} parent=11 // pred_region
          _
        $region28: #{tpu_custom_call.1} parent=11 // pred_fallthru
          _
      $region12: #{tpu_custom_call.1} parent=5 // pred_fallthru
        _
      %p262 = scmp.lt.s32.totalorder %s27, 2
      // Predicated region
      $region29: #{tpu_custom_call.1} parent=5 // pred_check
        %p263 = pneg %p262
      $region30: #{tpu_custom_call.1} parent=5 // pred_check_branch
        %265 = sbr.rel (%p263) target = $region32
      $region31: #{tpu_custom_call.1} parent=5 // pred_region
        // Predicated region
        $region33: #{tpu_custom_call.1} parent=31 // pred_check
          %p266 = pneg %p47
        $region34: #{tpu_custom_call.1} parent=31 // pred_check_branch
          %268 = sbr.rel (%p266) target = $region36
        $region35: #{tpu_custom_call.1} parent=31 // pred_region
          %s269 = sand.u32 %s37, 1
          %s270 = scalar_lea.sflag [#allocation3], %s269
          %s271 = sand.u32 %s37, 1
          %s272 = smul.addr %s271, 16
          %s273 = scalar_lea.vmem [#allocation2], %s272
          %s274 = smul.u32 2, %s27
          %s275 = ssub.s32 3, %s274
          %p276 = scmp.lt.s32.totalorder %s275, 2
          %s277 = scalar_select %p276, %s275, 2
          %s278 = smul.u32 128, %s277
          %s280 = ssub.s32 256, %s278
          %281 = vsyncadd %s270, %s280
          %p282 = scmp.ne.s32.totalorder 0, %s278
          %s283 = smul.addr %s274, 128
          %s284 = scalar_lea.hbm %s0, %s283
          %s285 = smul.u32 8, %s277
          %s286 = sshll.u32 %s273, 4
          %s287 = int_to_ptr.vmem [resolvable:$true] %s286
          %s288 = sshll.u32 %s285, 4
          %292 = dma.hbm_to_vmem [thread:$0]  (%p282), %s284, %s288, %s287, %s270, 128, 128, 8
        $region36: #{tpu_custom_call.1} parent=31 // pred_fallthru
          _
        // Predicated region
        $region37: #{tpu_custom_call.1} parent=31 // pred_check
          %p293 = pneg %p73
        $region38: #{tpu_custom_call.1} parent=31 // pred_check_branch
          %295 = sbr.rel (%p293) target = $region40
        $region39: #{tpu_custom_call.1} parent=31 // pred_region
          %s296 = sand.u32 %s27, 1
          %s297 = scalar_lea.sflag [#allocation6], %s296
          %s298 = sand.u32 %s63, 1
          %s299 = smul.addr %s298, 16
          %s300 = scalar_lea.vmem [#allocation5], %s299
          %s301 = smul.u32 2, %s27
          %s302 = ssub.s32 3, %s301
          %p303 = scmp.lt.s32.totalorder %s302, 2
          %s304 = scalar_select %p303, %s302, 2
          %s305 = smul.u32 128, %s304
          %s307 = ssub.s32 256, %s305
          %308 = vsyncadd %s297, %s307
          %p309 = scmp.ne.s32.totalorder 0, %s305
          %s310 = smul.addr %s301, 128
          %s311 = scalar_lea.hbm %s1, %s310
          %s312 = smul.u32 8, %s304
          %s313 = sshll.u32 %s300, 4
          %s314 = int_to_ptr.vmem [resolvable:$true] %s313
          %s315 = sshll.u32 %s312, 4
          %319 = dma.hbm_to_vmem [thread:$0]  (%p309), %s311, %s315, %s314, %s297, 128, 128, 8
        $region40: #{tpu_custom_call.1} parent=31 // pred_fallthru
          _
      $region32: #{tpu_custom_call.1} parent=5 // pred_fallthru
        _
      %p320 = scmp.le.s32.totalorder 1, %s27
      %p321 = scmp.lt.s32.totalorder %s27, 3
      %p322 = pnand %p320, %p321
      %p323 = pneg %p322
      // Predicated region
      $region41: #{tpu_custom_call.1} parent=5 // pred_check
        _
      $region42: #{tpu_custom_call.1} parent=5 // pred_check_branch
        %325 = sbr.rel (%p322) target = $region44
      $region43: #{tpu_custom_call.1} parent=5 // pred_region
        %s326 = ssub.s32 %s27, 1
        %s327 = sand.u32 %s40, 1
        %s328 = scalar_lea.sflag [#allocation3], %s327
        %s329 = sand.u32 %s40, 1
        %s330 = smul.addr %s329, 16
        %s331 = scalar_lea.vmem [#allocation2], %s330
        // Predicated region
        $region45: #{tpu_custom_call.1} parent=43 // pred_check
          %p332 = pneg %p53
        $region46: #{tpu_custom_call.1} parent=43 // pred_check_branch
          %334 = sbr.rel (%p332) target = $region48
        $region47: #{tpu_custom_call.1} parent=43 // pred_region
          %335 = dma.done %s328, 256
        $region48: #{tpu_custom_call.1} parent=43 // pred_fallthru
          _
        %s336 = sand.u32 %s32, 1
        %s337 = scalar_lea.sflag [#allocation6], %s336
        %s338 = sand.u32 %s66, 1
        %s339 = smul.addr %s338, 16
        %s340 = scalar_lea.vmem [#allocation5], %s339
        // Predicated region
        $region49: #{tpu_custom_call.1} parent=43 // pred_check
          %p341 = pneg %p79
        $region50: #{tpu_custom_call.1} parent=43 // pred_check_branch
          %343 = sbr.rel (%p341) target = $region52
        $region51: #{tpu_custom_call.1} parent=43 // pred_region
          %344 = dma.done %s337, 256
        $region52: #{tpu_custom_call.1} parent=43 // pred_fallthru
          _
        // Predicated region
        $region53: #{tpu_custom_call.1} parent=43 // pred_check
          %p345 = pneg %p121
        $region54: #{tpu_custom_call.1} parent=43 // pred_check_branch
          %347 = sbr.rel (%p345) target = $region56
        $region55: #{tpu_custom_call.1} parent=43 // pred_region
          %348 = dma.done [#allocation6], 1024
        $region56: #{tpu_custom_call.1} parent=43 // pred_fallthru
          _
        // Predicated region
        $region57: #{tpu_custom_call.1} parent=43 // pred_check
          %p349 = pneg %p142
        $region58: #{tpu_custom_call.1} parent=43 // pred_check_branch
          %351 = sbr.rel (%p349) target = $region60
        $region59: #{tpu_custom_call.1} parent=43 // pred_region
          %352 = dma.done [#allocation9], 4096
        $region60: #{tpu_custom_call.1} parent=43 // pred_fallthru
          _
        %s353 = sand.u32 %s40, 1
        %s354 = scalar_lea.sflag [#allocation3], %s353
        %s355 = sand.u32 %s40, 1
        %s356 = smul.addr %s355, 16
        %s357 = scalar_lea.vmem [#allocation2], %s356
        %p358 = pneg %p53
        %p359 = pneg %p50
        %s360 = sand.u32 %s32, 1
        %s361 = scalar_lea.sflag [#allocation6], %s360
        %s362 = sand.u32 %s66, 1
        %s363 = smul.addr %s362, 16
        %s364 = scalar_lea.vmem [#allocation5], %s363
        %p365 = pneg %p79
        %p366 = pneg %p76
        %p367 = pneg %p100
        %p368 = pneg %p97
        %p369 = pneg %p121
        %p370 = pneg %p118
        %p371 = pneg %p142
        %p372 = pneg %p139
        %p373 = pneg %p163
        %p374 = pneg %p160
        %p375 = pneg %p189
        %p376 = pneg %p186
        %s377 = sand.u32 %s176, 1
        %s378 = scalar_lea.sflag [#allocation4], %s377
        %s379 = sand.u32 %s176, 1
        %s380 = smul.addr %s379, 8
        %s381 = scalar_lea.vmem [#allocation10], %s380
        %p382 = pneg %p215
        %p383 = pneg %p212
        %s384 = sand.u32 %s202, 1
        %s385 = scalar_lea.sflag [#allocation12], %s384
        %s386 = sand.u32 %s202, 1
        %s387 = smul.addr %s386, 16
        %s388 = scalar_lea.vmem [#allocation11], %s387
        %s389 = smul.u32 2, %s32
        %s390 = ssub.s32 3, %s389
        %p391 = scmp.lt.s32.totalorder %s390, 2
        %s392 = scalar_select %p391, %s390, 2
        %s393 = smul.u32 128, %s392
        %s394 = smul.u32 2, %s32
        %s395 = ssub.s32 3, %s394
        %p396 = scmp.lt.s32.totalorder %s395, 2
        %s397 = scalar_select %p396, %s395, 2
        %s398 = smul.u32 128, %s397
        %s399 = smul.u32 2, %s32
        %s400 = ssub.s32 3, %s399
        %p401 = scmp.lt.s32.totalorder %s400, 2
        %s402 = scalar_select %p401, %s400, 2
        %s403 = smul.u32 128, %s402
        %v404 = vld [vmem:[%s5] sm:$0xff]
        %v405 = vld [vmem:[%s331] sm:$0xff]
        %v406 = vld [vmem:[%s331 + $0x8] sm:$0xff]
        %v407 = vld [vmem:[%s2] sm:$0xff]
        %v408 = vld [vmem:[%s2 + $0x8] sm:$0xff]
        %v409 = vld [vmem:[%s2 + $0x10] sm:$0xff]
        %v410 = vld [vmem:[%s2 + $0x18] sm:$0xff]
        %v411 = vld [vmem:[%s2 + $0x20] sm:$0x1]
        %v412 = vlaneseq
        %v413 = vshrl.u32 %v412, 7
        %v414 = vsub.s32 0, %v413
        %v415 = vrot.slane %v404, %v414
        %vm416 = vcmask 269312
        %v418 = vsel %vm416, %v405, 0
        %v421 = vsel %vm416, %v406, 0
        %vm423 = vcmask 1040384
        %v425 = vsel %vm423, %v411, 0
        %427 = vmatprep.subr.mxu0 0.0
        %428 = vmatpush1.msra.mxu0 0.0
        %429 = vmatprep.subr.mxu0 0.0
        %430 = vmatpush1.msra.mxu0 0.0
        %431 = vmatprep.subr.mxu0 0.0
        %432 = vmatpush1.msra.mxu0 0.0
        %433 = vmatprep.subr.mxu0 0.0
        %434 = vmatpush1.msra.mxu0 0.0
        %435 = vmatprep.subr.mxu0 0.0
        %436 = vmatpush1.msra.mxu0 0.0
        %437 = vmatprep.subr.mxu0 0.0
        %438 = vmatpush1.msra.mxu0 0.0
        %439 = vmatprep.subr.mxu0 0.0
        %440 = vmatpush1.msra.mxu0 0.0
        %441 = vmatprep.subr.mxu0 0.0
        %442 = vmatpush1.msra.mxu0 0.0
        %443 = vmatprep.subr.mxu0 0.0
        %444 = vmatpush1.msra.mxu0 0.0
        %445 = vmatprep.subr.mxu0 0.0
        %446 = vmatpush1.msra.mxu0 0.0
        %447 = vmatprep.subr.mxu0 0.0
        %448 = vmatpush1.msra.mxu0 0.0
        %449 = vmatprep.subr.mxu0 0.0
        %450 = vmatpush1.msra.mxu0 %v425
        %451 = vmatprep.subr.mxu0 0.0
        %452 = vmatpush1.msra.mxu0 %v410
        %453 = vmatprep.subr.mxu0 0.0
        %454 = vmatpush1.msra.mxu0 %v409
        %455 = vmatprep.subr.mxu0 0.0
        %456 = vmatpush1.msra.mxu0 %v408
        %457 = vmatprep.subr.mxu0 0.0
        %458 = vmatpush1.msra.mxu0 %v407
        %459 = vmatprep.subr.mxu0 0.0
        %460 = vmatpush2.msra.mxu0 0.0
        %461 = vmatprep.subr.mxu0 0.0
        %462 = vmatpush2.msra.mxu0 0.0
        %463 = vmatprep.subr.mxu0 0.0
        %464 = vmatpush2.msra.mxu0 0.0
        %465 = vmatprep.subr.mxu0 0.0
        %466 = vmatpush2.msra.mxu0 0.0
        %467 = vmatprep.subr.mxu0 0.0
        %468 = vmatpush2.msra.mxu0 0.0
        %469 = vmatprep.subr.mxu0 0.0
        %470 = vmatpush2.msra.mxu0 0.0
        %471 = vmatprep.subr.mxu0 0.0
        %472 = vmatpush2.msra.mxu0 0.0
        %473 = vmatprep.subr.mxu0 0.0
        %474 = vmatpush2.msra.mxu0 0.0
        %475 = vmatprep.subr.mxu0 0.0
        %476 = vmatpush2.msra.mxu0 0.0
        %477 = vmatprep.subr.mxu0 0.0
        %478 = vmatpush2.msra.mxu0 0.0
        %479 = vmatprep.subr.mxu0 0.0
        %480 = vmatpush2.msra.mxu0 0.0
        %481 = vmatprep.subr.mxu0 0.0
        %482 = vmatpush2.msra.mxu0 0.0
        %483 = vmatprep.subr.mxu0 0.0
        %484 = vmatpush2.msra.mxu0 0.0
        %485 = vmatprep.subr.mxu0 0.0
        %486 = vmatpush2.msra.mxu0 0.0
        %487 = vmatprep.subr.mxu0 0.0
        %488 = vmatpush2.msra.mxu0 0.0
        %489 = vmatprep.subr.mxu0 0.0
        %490 = vmatpush2.msra.mxu0 0.0
        %491 = vmatprep.mubr.f32.mxu0 0.0
        %492 = vmatmul.mubr.f32.gmra.mxu0 %v418
        %v493 = vpop.f32.mrf.mxu0
        %v494 = vadd.f32 %v415, %v493
        %v495 = vpop.f32.mrf.mxu0
        %496 = vmatprep.mubr.f32.mxu0 0.0
        %497 = vmatmul.mubr.f32.gmra.mxu0 %v421
        %v498 = vpop.f32.mrf.mxu0
        %v499 = vadd.f32 %v415, %v498
        %v500 = vpop.f32.mrf.mxu0
        %501 = vdwg.mxu0
        %v502 = vmax.f32 %v494, 0.0
        %v503 = vmax.f32 %v499, 0.0
        %v504 = vld [vmem:[#allocation7] sm:$0xff]
        %v505 = vld [vmem:[#allocation7 + $0x8] sm:$0xff]
        %v506 = vld [vmem:[#allocation7 + $0x10] sm:$0xff]
        %v507 = vld [vmem:[#allocation7 + $0x18] sm:$0xff]
        %v508 = vld [vmem:[#allocation7 + $0x20] sm:$0xff]
        %v509 = vld [vmem:[#allocation7 + $0x28] sm:$0xff]
        %v510 = vld [vmem:[#allocation7 + $0x30] sm:$0xff]
        %v511 = vld [vmem:[#allocation7 + $0x38] sm:$0xff]
        %v512 = vlaneseq
        %v513 = vshrl.u32 %v512, 7
        %v514 = vsub.s32 1, %v513
        %v515 = vrot.slane %v404, %v514
        %vm516 = vcmask 523264
        %v518 = vsel %vm516, %v502, 0
        %v521 = vsel %vm516, %v503, 0
        %523 = vmatprep.subr.mxu0 0.0
        %524 = vmatpush1.msra.mxu0 0.0
        %525 = vmatprep.subr.mxu0 0.0
        %526 = vmatpush1.msra.mxu0 0.0
        %527 = vmatprep.subr.mxu0 0.0
        %528 = vmatpush1.msra.mxu0 0.0
        %529 = vmatprep.subr.mxu0 0.0
        %530 = vmatpush1.msra.mxu0 0.0
        %531 = vmatprep.subr.mxu0 0.0
        %532 = vmatpush1.msra.mxu0 0.0
        %533 = vmatprep.subr.mxu0 0.0
        %534 = vmatpush1.msra.mxu0 0.0
        %535 = vmatprep.subr.mxu0 0.0
        %536 = vmatpush1.msra.mxu0 0.0
        %537 = vmatprep.subr.mxu0 0.0
        %538 = vmatpush1.msra.mxu0 0.0
        %539 = vmatprep.subr.mxu0 0.0
        %540 = vmatpush1.msra.mxu0 %v511
        %541 = vmatprep.subr.mxu0 0.0
        %542 = vmatpush1.msra.mxu0 %v510
        %543 = vmatprep.subr.mxu0 0.0
        %544 = vmatpush1.msra.mxu0 %v509
        %545 = vmatprep.subr.mxu0 0.0
        %546 = vmatpush1.msra.mxu0 %v508
        %547 = vmatprep.subr.mxu0 0.0
        %548 = vmatpush1.msra.mxu0 %v507
        %549 = vmatprep.subr.mxu0 0.0
        %550 = vmatpush1.msra.mxu0 %v506
        %551 = vmatprep.subr.mxu0 0.0
        %552 = vmatpush1.msra.mxu0 %v505
        %553 = vmatprep.subr.mxu0 0.0
        %554 = vmatpush1.msra.mxu0 %v504
        %555 = vmatprep.subr.mxu0 0.0
        %556 = vmatpush2.msra.mxu0 0.0
        %557 = vmatprep.subr.mxu0 0.0
        %558 = vmatpush2.msra.mxu0 0.0
        %559 = vmatprep.subr.mxu0 0.0
        %560 = vmatpush2.msra.mxu0 0.0
        %561 = vmatprep.subr.mxu0 0.0
        %562 = vmatpush2.msra.mxu0 0.0
        %563 = vmatprep.subr.mxu0 0.0
        %564 = vmatpush2.msra.mxu0 0.0
        %565 = vmatprep.subr.mxu0 0.0
        %566 = vmatpush2.msra.mxu0 0.0
        %567 = vmatprep.subr.mxu0 0.0
        %568 = vmatpush2.msra.mxu0 0.0
        %569 = vmatprep.subr.mxu0 0.0
        %570 = vmatpush2.msra.mxu0 0.0
        %571 = vmatprep.subr.mxu0 0.0
        %572 = vmatpush2.msra.mxu0 0.0
        %573 = vmatprep.subr.mxu0 0.0
        %574 = vmatpush2.msra.mxu0 0.0
        %575 = vmatprep.subr.mxu0 0.0
        %576 = vmatpush2.msra.mxu0 0.0
        %577 = vmatprep.subr.mxu0 0.0
        %578 = vmatpush2.msra.mxu0 0.0
        %579 = vmatprep.subr.mxu0 0.0
        %580 = vmatpush2.msra.mxu0 0.0
        %581 = vmatprep.subr.mxu0 0.0
        %582 = vmatpush2.msra.mxu0 0.0
        %583 = vmatprep.subr.mxu0 0.0
        %584 = vmatpush2.msra.mxu0 0.0
        %585 = vmatprep.subr.mxu0 0.0
        %586 = vmatpush2.msra.mxu0 0.0
        %587 = vmatprep.mubr.f32.mxu0 0.0
        %588 = vmatmul.mubr.f32.gmra.mxu0 %v518
        %v589 = vpop.f32.mrf.mxu0
        %v590 = vadd.f32 %v515, %v589
        %v591 = vpop.f32.mrf.mxu0
        %592 = vmatprep.mubr.f32.mxu0 0.0
        %593 = vmatmul.mubr.f32.gmra.mxu0 %v521
        %v594 = vpop.f32.mrf.mxu0
        %v595 = vadd.f32 %v515, %v594
        %v596 = vpop.f32.mrf.mxu0
        %597 = vdwg.mxu0
        %v598 = vmax.f32 %v590, 0.0
        %v599 = vmax.f32 %v595, 0.0
        %v600 = vld [vmem:[%s340] sm:$0xff]
        %v601 = vld [vmem:[%s340 + $0x8] sm:$0xff]
        %602 = vset.pattern.permute.xlu0 32
        %603 = vperm.xlu0 %602, %v405
        %v604 = vpop.permute.xlu0 %603
        %606 = vset.pattern.permute.xlu0 32
        %607 = vperm.xlu0 %606, %v406
        %v608 = vpop.permute.xlu0 %607
        %v610 = vmul.f32 %v600, %v604
        %v611 = vmul.f32 %v601, %v608
        %614 = vrot.lane.b32.xlu0 %v610, 64
        %v615 = vpop.permute.xlu0 %614
        %616 = vrot.lane.b32.xlu0 %v611, 64
        %v617 = vpop.permute.xlu0 %616
        %v620 = vsel %vm516, %v598, %v615
        %v621 = vsel %vm516, %v599, %v617
        %v622 = vld [vmem:[#allocation8] sm:$0xff]
        %v623 = vld [vmem:[#allocation8 + $0x8] sm:$0xff]
        %v624 = vld [vmem:[#allocation8 + $0x10] sm:$0xff]
        %v625 = vld [vmem:[#allocation8 + $0x18] sm:$0xff]
        %v626 = vld [vmem:[#allocation8 + $0x20] sm:$0xff]
        %v627 = vld [vmem:[#allocation8 + $0x28] sm:$0xff]
        %v628 = vld [vmem:[#allocation8 + $0x30] sm:$0xff]
        %v629 = vld [vmem:[#allocation8 + $0x38] sm:$0xff]
        %v630 = vld [vmem:[#allocation8 + $0x40] sm:$0xff]
        %v631 = vld [vmem:[#allocation8 + $0x48] sm:$0xff]
        %v632 = vld [vmem:[#allocation8 + $0x50] sm:$0xff]
        %v633 = vld [vmem:[#allocation8 + $0x58] sm:$0xff]
        %v634 = vld [vmem:[#allocation8 + $0x60] sm:$0xff]
        %v635 = vld [vmem:[#allocation8 + $0x68] sm:$0xff]
        %v636 = vld [vmem:[#allocation8 + $0x70] sm:$0xff]
        %v637 = vld [vmem:[#allocation8 + $0x78] sm:$0xff]
        %v638 = vld [vmem:[#allocation8 + $0x80] sm:$0xff]
        %v639 = vld [vmem:[#allocation8 + $0x88] sm:$0xff]
        %v640 = vld [vmem:[#allocation8 + $0x90] sm:$0xff]
        %v641 = vld [vmem:[#allocation8 + $0x98] sm:$0xff]
        %v642 = vld [vmem:[#allocation8 + $0xa0] sm:$0xff]
        %v643 = vld [vmem:[#allocation8 + $0xa8] sm:$0xff]
        %v644 = vld [vmem:[#allocation8 + $0xb0] sm:$0xff]
        %v645 = vld [vmem:[#allocation8 + $0xb8] sm:$0xff]
        %v646 = vld [vmem:[#allocation8 + $0xc0] sm:$0xff]
        %v647 = vld [vmem:[#allocation8 + $0xc8] sm:$0xff]
        %v648 = vld [vmem:[#allocation8 + $0xd0] sm:$0xff]
        %v649 = vld [vmem:[#allocation8 + $0xd8] sm:$0xff]
        %v650 = vld [vmem:[#allocation8 + $0xe0] sm:$0xff]
        %v651 = vld [vmem:[#allocation8 + $0xe8] sm:$0xff]
        %v652 = vld [vmem:[#allocation8 + $0xf0] sm:$0xff]
        %v653 = vld [vmem:[#allocation8 + $0xf8] sm:$0xff]
        %654 = vmatprep.subr.mxu0 %v653
        %655 = vmatpush1.msra.mxu0 %v652
        %656 = vmatprep.subr.mxu0 %v651
        %657 = vmatpush1.msra.mxu0 %v650
        %658 = vmatprep.subr.mxu0 %v649
        %659 = vmatpush1.msra.mxu0 %v648
        %660 = vmatprep.subr.mxu0 %v647
        %661 = vmatpush1.msra.mxu0 %v646
        %662 = vmatprep.subr.mxu0 %v645
        %663 = vmatpush1.msra.mxu0 %v644
        %664 = vmatprep.subr.mxu0 %v643
        %665 = vmatpush1.msra.mxu0 %v642
        %666 = vmatprep.subr.mxu0 %v641
        %667 = vmatpush1.msra.mxu0 %v640
        %668 = vmatprep.subr.mxu0 %v639
        %669 = vmatpush1.msra.mxu0 %v638
        %670 = vmatprep.subr.mxu0 %v637
        %671 = vmatpush1.msra.mxu0 %v636
        %672 = vmatprep.subr.mxu0 %v635
        %673 = vmatpush1.msra.mxu0 %v634
        %674 = vmatprep.subr.mxu0 %v633
        %675 = vmatpush1.msra.mxu0 %v632
        %676 = vmatprep.subr.mxu0 %v631
        %677 = vmatpush1.msra.mxu0 %v630
        %678 = vmatprep.subr.mxu0 %v629
        %679 = vmatpush1.msra.mxu0 %v628
        %680 = vmatprep.subr.mxu0 %v627
        %681 = vmatpush1.msra.mxu0 %v626
        %682 = vmatprep.subr.mxu0 %v625
        %683 = vmatpush1.msra.mxu0 %v624
        %684 = vmatprep.subr.mxu0 %v623
        %685 = vmatpush1.msra.mxu0 %v622
        %686 = vmatprep.subr.mxu0 0.0
        %687 = vmatpush2.msra.mxu0 0.0
        %688 = vmatprep.subr.mxu0 0.0
        %689 = vmatpush2.msra.mxu0 0.0
        %690 = vmatprep.subr.mxu0 0.0
        %691 = vmatpush2.msra.mxu0 0.0
        %692 = vmatprep.subr.mxu0 0.0
        %693 = vmatpush2.msra.mxu0 0.0
        %694 = vmatprep.subr.mxu0 0.0
        %695 = vmatpush2.msra.mxu0 0.0
        %696 = vmatprep.subr.mxu0 0.0
        %697 = vmatpush2.msra.mxu0 0.0
        %698 = vmatprep.subr.mxu0 0.0
        %699 = vmatpush2.msra.mxu0 0.0
        %700 = vmatprep.subr.mxu0 0.0
        %701 = vmatpush2.msra.mxu0 0.0
        %702 = vmatprep.subr.mxu0 0.0
        %703 = vmatpush2.msra.mxu0 0.0
        %704 = vmatprep.subr.mxu0 0.0
        %705 = vmatpush2.msra.mxu0 0.0
        %706 = vmatprep.subr.mxu0 0.0
        %707 = vmatpush2.msra.mxu0 0.0
        %708 = vmatprep.subr.mxu0 0.0
        %709 = vmatpush2.msra.mxu0 0.0
        %710 = vmatprep.subr.mxu0 0.0
        %711 = vmatpush2.msra.mxu0 0.0
        %712 = vmatprep.subr.mxu0 0.0
        %713 = vmatpush2.msra.mxu0 0.0
        %714 = vmatprep.subr.mxu0 0.0
        %715 = vmatpush2.msra.mxu0 0.0
        %716 = vmatprep.subr.mxu0 0.0
        %717 = vmatpush2.msra.mxu0 0.0
        %718 = vmatprep.mubr.f32.mxu0 0.0
        %719 = vmatmul.mubr.f32.gmra.mxu0 %v620
        %v720 = vpop.f32.mrf.mxu0
        %v721 = vadd.f32 0.0, %v720
        %v722 = vpop.f32.mrf.mxu0
        %v723 = vadd.f32 0.0, %v722
        %724 = vmatprep.mubr.f32.mxu0 0.0
        %725 = vmatmul.mubr.f32.gmra.mxu0 %v621
        %v726 = vpop.f32.mrf.mxu0
        %v727 = vadd.f32 0.0, %v726
        %v728 = vpop.f32.mrf.mxu0
        %v729 = vadd.f32 0.0, %v728
        %730 = vdwg.mxu0
        %v731 = vlaneseq
        %v732 = vshrl.u32 %v731, 7
        %v733 = vsub.s32 2, %v732
        %v734 = vrot.slane %v404, %v733
        %v735 = vadd.f32 %v721, %v734
        %v736 = vadd.f32 %v727, %v734
        %v737 = vxor.u32 %v735, 2147483648
        %v738 = vxor.u32 %v736, 2147483648
        %v739 = vmul.f32 %v737, 1.442695
        %v740 = vpow.pop %v739
        %v741 = vmul.f32 %v738, 1.442695
        %v742 = vpow.pop %v741
        %v743 = vadd.f32 %v740, 1.0
        %v744 = vadd.f32 %v742, 1.0
        %v745 = vrcp.pop %v743
        %v746 = vmul.f32 1.0, %v745
        %v747 = vrcp.pop %v744
        %v748 = vmul.f32 1.0, %v747
        %v749 = vlaneseq
        %v750 = vshrl.u32 %v749, 7
        %v751 = vsub.s32 3, %v750
        %v752 = vrot.slane %v404, %v751
        %v753 = vadd.f32 %v723, %v752
        %v754 = vadd.f32 %v729, %v752
        %v755 = vlaneseq
        %v756 = vshrl.u32 %v755, 7
        %v757 = vsub.s32 4, %v756
        %v758 = vrot.slane %v404, %v757
        %760 = vrot.lane.b32.xlu0 %v758, 64
        %v761 = vpop.permute.xlu0 %760
        %v763 = vadd.f32 %v723, %v761
        %v764 = vadd.f32 %v729, %v761
        %767 = vrot.lane.b32.xlu0 %v763, 64
        %v768 = vpop.permute.xlu0 %767
        %769 = vrot.lane.b32.xlu0 %v764, 64
        %v770 = vpop.permute.xlu0 %769
        %v773 = vmul.f32 %v746, %v768
        %v774 = vmul.f32 %v748, %v770
        %v775 = vadd.f32 %v753, %v773
        %v776 = vadd.f32 %v754, %v774
        %v777 = vtanh.pop %v775
        %v778 = vtanh.pop %v776
        %v779 = vsub.f32 1.0, %v746
        %v780 = vsub.f32 1.0, %v748
        %783 = vrot.lane.b32.xlu0 %v777, 64
        %v784 = vpop.permute.xlu0 %783
        %785 = vrot.lane.b32.xlu0 %v778, 64
        %v786 = vpop.permute.xlu0 %785
        %v789 = vmul.f32 %v779, %v784
        %v790 = vmul.f32 %v780, %v786
        %v791 = vmul.f32 %v746, %v615
        %v792 = vmul.f32 %v748, %v617
        %v793 = vadd.f32 %v789, %v791
        %v794 = vadd.f32 %v790, %v792
        %797 = vrot.lane.b32.xlu0 %v793, 64
        %v798 = vpop.permute.xlu0 %797
        %799 = vrot.lane.b32.xlu0 %v794, 64
        %v800 = vpop.permute.xlu0 %799
        %v803 = vsel %vm516, %v798, 0.0
        %804 = vadd.xlane.f32.xlu0 %v803
        %v805 = vpop.xlane.xlu0 %804
        %v806 = vsel %vm516, %v800, 0.0
        %807 = vadd.xlane.f32.xlu0 %v806
        %v808 = vpop.xlane.xlu0 %807
        %v809 = vrcp.pop 64.0
        %v810 = vmul.f32 %v805, %v809
        %v811 = vmul.f32 %v808, %v809
        %v812 = vsub.f32 %v793, %v810
        %v813 = vsub.f32 %v794, %v811
        %v814 = vmul.f32 %v812, %v812
        %v815 = vmul.f32 %v813, %v813
        %818 = vrot.lane.b32.xlu0 %v814, 64
        %v819 = vpop.permute.xlu0 %818
        %820 = vrot.lane.b32.xlu0 %v815, 64
        %v821 = vpop.permute.xlu0 %820
        %v824 = vsel %vm516, %v819, 0.0
        %825 = vadd.xlane.f32.xlu0 %v824
        %v826 = vpop.xlane.xlu0 %825
        %v827 = vsel %vm516, %v821, 0.0
        %828 = vadd.xlane.f32.xlu0 %v827
        %v829 = vpop.xlane.xlu0 %828
        %v830 = vmul.f32 %v826, %v809
        %v831 = vmul.f32 %v829, %v809
        %v832 = vadd.f32 %v830, 1e-05
        %v833 = vadd.f32 %v831, 1e-05
        %v834 = vrsqrt.pop %v832
        %v835 = vrsqrt.pop %v833
        %v836 = vmul.f32 %v812, %v834
        %v837 = vmul.f32 %v813, %v835
        %839 = vset.pattern.permute.xlu0 0
        %840 = vperm.xlu0 %839, %v404
        %v841 = vpop.permute.xlu0 %840
        %v842 = vrot.slane %v404, 5
        %845 = vrot.lane.b32.xlu0 %v836, 64
        %v846 = vpop.permute.xlu0 %845
        %847 = vrot.lane.b32.xlu0 %v837, 64
        %v848 = vpop.permute.xlu0 %847
        %v849 = vrot.slane %v841, 6
        %v851 = vsel %vm516, %v842, 0
        %v853 = vsel %vm516, %v846, 0
        %v855 = vsel %vm516, %v848, 0
        %857 = vmatprep.subr.mxu0 0.0
        %858 = vmatpush1.xpose.msra.mxu0 0.0
        %859 = vmatprep.subr.mxu0 0.0
        %860 = vmatpush1.xpose.msra.mxu0 0.0
        %861 = vmatprep.subr.mxu0 0.0
        %862 = vmatpush1.xpose.msra.mxu0 0.0
        %863 = vmatprep.subr.mxu0 0.0
        %864 = vmatpush1.xpose.msra.mxu0 0.0
        %865 = vmatprep.subr.mxu0 0.0
        %866 = vmatpush1.xpose.msra.mxu0 0.0
        %867 = vmatprep.subr.mxu0 0.0
        %868 = vmatpush1.xpose.msra.mxu0 0.0
        %869 = vmatprep.subr.mxu0 0.0
        %870 = vmatpush1.xpose.msra.mxu0 0.0
        %871 = vmatprep.subr.mxu0 0.0
        %872 = vmatpush1.xpose.msra.mxu0 0.0
        %873 = vmatprep.subr.mxu0 0.0
        %874 = vmatpush1.xpose.msra.mxu0 0.0
        %875 = vmatprep.subr.mxu0 0.0
        %876 = vmatpush1.xpose.msra.mxu0 0.0
        %877 = vmatprep.subr.mxu0 0.0
        %878 = vmatpush1.xpose.msra.mxu0 0.0
        %879 = vmatprep.subr.mxu0 0.0
        %880 = vmatpush1.xpose.msra.mxu0 0.0
        %881 = vmatprep.subr.mxu0 0.0
        %882 = vmatpush1.xpose.msra.mxu0 0.0
        %883 = vmatprep.subr.mxu0 0.0
        %884 = vmatpush1.xpose.msra.mxu0 0.0
        %885 = vmatprep.subr.mxu0 0.0
        %886 = vmatpush1.xpose.msra.mxu0 %v855
        %887 = vmatprep.subr.mxu0 0.0
        %888 = vmatpush1.xpose.msra.mxu0 %v853
        %889 = vmatprep.subr.mxu0 0.0
        %890 = vmatpush2.xpose.msra.mxu0 0.0
        %891 = vmatprep.subr.mxu0 0.0
        %892 = vmatpush2.xpose.msra.mxu0 0.0
        %893 = vmatprep.subr.mxu0 0.0
        %894 = vmatpush2.xpose.msra.mxu0 0.0
        %895 = vmatprep.subr.mxu0 0.0
        %896 = vmatpush2.xpose.msra.mxu0 0.0
        %897 = vmatprep.subr.mxu0 0.0
        %898 = vmatpush2.xpose.msra.mxu0 0.0
        %899 = vmatprep.subr.mxu0 0.0
        %900 = vmatpush2.xpose.msra.mxu0 0.0
        %901 = vmatprep.subr.mxu0 0.0
        %902 = vmatpush2.xpose.msra.mxu0 0.0
        %903 = vmatprep.subr.mxu0 0.0
        %904 = vmatpush2.xpose.msra.mxu0 0.0
        %905 = vmatprep.subr.mxu0 0.0
        %906 = vmatpush2.xpose.msra.mxu0 0.0
        %907 = vmatprep.subr.mxu0 0.0
        %908 = vmatpush2.xpose.msra.mxu0 0.0
        %909 = vmatprep.subr.mxu0 0.0
        %910 = vmatpush2.xpose.msra.mxu0 0.0
        %911 = vmatprep.subr.mxu0 0.0
        %912 = vmatpush2.xpose.msra.mxu0 0.0
        %913 = vmatprep.subr.mxu0 0.0
        %914 = vmatpush2.xpose.msra.mxu0 0.0
        %915 = vmatprep.subr.mxu0 0.0
        %916 = vmatpush2.xpose.msra.mxu0 0.0
        %917 = vmatprep.subr.mxu0 0.0
        %918 = vmatpush2.xpose.msra.mxu0 0.0
        %919 = vmatprep.subr.mxu0 0.0
        %920 = vmatpush2.xpose.msra.mxu0 0.0
        %921 = vmatprep.mubr.f32.mxu0 0.0
        %922 = vmatmul.mubr.f32.gmra.mxu0 %v851
        %v923 = vpop.f32.mrf.mxu0
        %v924 = vadd.f32 %v849, %v923
        %v925 = vpop.f32.mrf.mxu0
        %926 = vdwg.mxu0
        %v927 = vlaneseq
        %v928 = vshrl.u32 %v927, 7
        %v929 = vsub.s32 0, %v928
        %v930 = vrot.slane %v924, %v929
        %vm931 = vcmask 130048
        %932 = vst.msk [vmem:[%s381] sm:$0xff] %vm931, %v930
        %933 = vst.msk [vmem:[%s388] sm:$0xff] %vm516, %v798
        %934 = vst.msk [vmem:[%s388 + $0x8] sm:$0xff] %vm516, %v800
        %s935 = sand.u32 %s176, 1
        %s936 = scalar_lea.sflag [#allocation4], %s935
        %s937 = sand.u32 %s176, 1
        %s938 = smul.addr %s937, 8
        %s939 = scalar_lea.vmem [#allocation10], %s938
        %s940 = sand.u32 %s202, 1
        %s941 = scalar_lea.sflag [#allocation12], %s940
        %s942 = sand.u32 %s202, 1
        %s943 = smul.addr %s942, 16
        %s944 = scalar_lea.vmem [#allocation11], %s943
        // Predicated region
        $region61: #{tpu_custom_call.1} parent=43 // pred_check
          %p945 = pneg %p186
        $region62: #{tpu_custom_call.1} parent=43 // pred_check_branch
          %947 = sbr.rel (%p945) target = $region64
        $region63: #{tpu_custom_call.1} parent=43 // pred_region
          %s949 = ssub.s32 128, 128
          %950 = vsyncadd %s936, %s949
          %s951 = smul.addr %s32, 128
          %s952 = scalar_lea.hbm %s6, %s951
          %s954 = sshll.u32 %s939, 4
          %s955 = int_to_ptr.vmem [resolvable:$true] %s954
          %957 = dma.vmem_to_hbm [thread:$0]  %s955, 128, %s952, %s936
        $region64: #{tpu_custom_call.1} parent=43 // pred_fallthru
          _
        // Predicated region
        $region65: #{tpu_custom_call.1} parent=43 // pred_check
          %p958 = pneg %p212
        $region66: #{tpu_custom_call.1} parent=43 // pred_check_branch
          %960 = sbr.rel (%p958) target = $region68
        $region67: #{tpu_custom_call.1} parent=43 // pred_region
          %s961 = smul.u32 2, %s32
          %s962 = ssub.s32 3, %s961
          %p963 = scmp.lt.s32.totalorder %s962, 2
          %s964 = scalar_select %p963, %s962, 2
          %s965 = smul.u32 128, %s964
          %s967 = ssub.s32 256, %s965
          %968 = vsyncadd %s941, %s967
          %p969 = scmp.ne.s32.totalorder 0, %s965
          %s970 = smul.addr %s961, 128
          %s971 = scalar_lea.hbm %s7, %s970
          %s972 = smul.u32 8, %s964
          %s973 = sshll.u32 %s944, 4
          %s974 = int_to_ptr.vmem [resolvable:$true] %s973
          %s975 = sshll.u32 %s972, 4
          %979 = dma.vmem_to_hbm [thread:$0]  (%p969), %s974, %s975, %s971, %s941, 128, 128, 8
        $region68: #{tpu_custom_call.1} parent=43 // pred_fallthru
          _
      $region44: #{tpu_custom_call.1} parent=5 // pred_fallthru
        _
      %p980 = scmp.le.s32.totalorder 2, %s27
      // Predicated region
      $region69: #{tpu_custom_call.1} parent=5 // pred_check
        %p981 = pneg %p980
      $region70: #{tpu_custom_call.1} parent=5 // pred_check_branch
        %983 = sbr.rel (%p981) target = $region72
      $region71: #{tpu_custom_call.1} parent=5 // pred_region
        %s984 = ssub.s32 %s27, 2
        // Predicated region
        $region73: #{tpu_custom_call.1} parent=71 // pred_check
          %p985 = pneg %p192
        $region74: #{tpu_custom_call.1} parent=71 // pred_check_branch
          %987 = sbr.rel (%p985) target = $region76
        $region75: #{tpu_custom_call.1} parent=71 // pred_region
          %s988 = sand.u32 %s177, 1
          %s989 = scalar_lea.sflag [#allocation4], %s988
          %s990 = sand.u32 %s177, 1
          %s991 = smul.addr %s990, 8
          %s992 = scalar_lea.vmem [#allocation10], %s991
          %993 = dma.done %s989, 128
        $region76: #{tpu_custom_call.1} parent=71 // pred_fallthru
          _
        // Predicated region
        $region77: #{tpu_custom_call.1} parent=71 // pred_check
          %p994 = pneg %p218
        $region78: #{tpu_custom_call.1} parent=71 // pred_check_branch
          %996 = sbr.rel (%p994) target = $region80
        $region79: #{tpu_custom_call.1} parent=71 // pred_region
          %s997 = sand.u32 %s203, 1
          %s998 = scalar_lea.sflag [#allocation12], %s997
          %s999 = sand.u32 %s203, 1
          %s1000 = smul.addr %s999, 16
          %s1001 = scalar_lea.vmem [#allocation11], %s1000
          %1002 = dma.done %s998, 256
        $region80: #{tpu_custom_call.1} parent=71 // pred_fallthru
          _
      $region72: #{tpu_custom_call.1} parent=5 // pred_fallthru
        _
    $region6: #{tpu_custom_call.1} parent=1 // loop_footer
      %s31 = sadd.s32 1, %s27
    $region7: #{tpu_custom_call.1} parent=1 // loop_footer_branch
      %26 = sbr.rel target = $region3
    $region8: #{tpu_custom_call.1} parent=1 // loop_exit
      _
    %1003 = vsyncpa [#allocation3], 1
    %s1004 = scalar_lea.sflag [#allocation3], 1
    %1005 = vsyncpa %s1004, 1
    %1006 = vsyncpa [#allocation6], 1
    %s1007 = scalar_lea.sflag [#allocation6], 1
    %1008 = vsyncpa %s1007, 1
    %1009 = vsyncpa [#allocation9], 1
    %1010 = vsyncpa [#allocation4], 1
    %s1011 = scalar_lea.sflag [#allocation4], 1
    %1012 = vsyncpa %s1011, 1
    %1013 = vsyncpa [#allocation12], 1
    %s1014 = scalar_lea.sflag [#allocation12], 1
    %1015 = vsyncpa %s1014, 1

</llo_original>
